<compile_context>
chip_gen: v5e
topology: v5e:2x2
jax: 0.10.0
libtpu: 0.0.40
codegen_flags: <defaults>
</compile_context>

<pallas_src>
import functools

import jax
import jax.numpy as jnp
from jax.experimental import pallas as pl
from jax.experimental.pallas import tpu as pltpu


def _round_up(x, m):
    return ((x + m - 1) // m) * m


def _tiles_for(n):
    """Square adjacency tile: multiple of 128 (v5e MXU), capped at 512."""
    tile = min(512, _round_up(max(n, 1), 128))
    npad = _round_up(max(n, 1), tile)
    return npad, tile, tile


def _propagate_kernel(adj_ref, cur_ref, sum_ref, next_ref, sum_out_ref, acc_ref):
    """One (row-tile, K-tile) step of: next = adj @ cur ; sum_out = sum + next."""
    k = pl.program_id(1)

    @pl.when(k == 0)
    def _init():
        acc_ref[...] = jnp.zeros_like(acc_ref)

    # MXU matmul on the streamed adjacency tile; f32 accumulation regardless of
    # the (possibly bf16) operand dtype.
    acc_ref[...] += jnp.dot(
        adj_ref[...], cur_ref[...], preferred_element_type=jnp.float32
    )

    @pl.when(k == pl.num_programs(1) - 1)
    def _finalize():
        next_ref[...] = acc_ref[...].astype(next_ref.dtype)
        sum_out_ref[...] = sum_ref[...] + acc_ref[...]


def _make_propagate(npad, dpad, tm, tk, compute_dtype):
    grid = (npad // tm, npad // tk)
    return pl.pallas_call(
        _propagate_kernel,
        out_shape=(
            jax.ShapeDtypeStruct((npad, dpad), compute_dtype),  # next-layer embeddings
            jax.ShapeDtypeStruct((npad, dpad), jnp.float32),    # running layer sum
        ),
        grid=grid,
        in_specs=[
            pl.BlockSpec((tm, tk), lambda i, k: (i, k)),        # adjacency tile (streamed)
            pl.BlockSpec((tk, dpad), lambda i, k: (k, 0)),      # current-emb K slab
            pl.BlockSpec((tm, dpad), lambda i, k: (i, 0)),      # running-sum row tile
        ],
        out_specs=(
            pl.BlockSpec((tm, dpad), lambda i, k: (i, 0)),
            pl.BlockSpec((tm, dpad), lambda i, k: (i, 0)),
        ),
        scratch_shapes=[pltpu.VMEM((tm, dpad), jnp.float32)],
        input_output_aliases={2: 1},                            # layer sum updated in place
        compiler_params=pltpu.CompilerParams(
            dimension_semantics=("parallel", "arbitrary"),
            vmem_limit_bytes=32 * 1024 * 1024,
        ),
    )


@functools.partial(jax.jit, static_argnames=("n_layers", "compute_dtype"))
def gnn_encoder_adj_mat(users_emb, items_emb, graph, *, n_layers,
                        compute_dtype=jnp.float32):
    """Pallas implementation of GNN_Encoder_adj_mat.forward (dense adjacency)."""
    num_users, d = users_emb.shape
    num_items = items_emb.shape[0]
    n = num_users + num_items
    assert graph.shape == (n, n)

    npad, tm, tk = _tiles_for(n)
    dpad = _round_up(d, 128)  # lane-dense output blocks

    # Stacked + padded layer-0 embeddings (users/items written directly into the
    # padded slab -- no standalone concatenate materialization).
    emb0 = jnp.zeros((npad, dpad), jnp.float32)
    emb0 = emb0.at[:num_users, :d].set(users_emb.astype(jnp.float32))
    emb0 = emb0.at[num_users:n, :d].set(items_emb.astype(jnp.float32))

    # Adjacency cast once to the matmul dtype and zero-padded; streamed tile by
    # tile every layer (HBM traffic = n_layers * Npad^2 * itemsize).
    adj = jnp.pad(graph.astype(compute_dtype), ((0, npad - n), (0, npad - n)))

    propagate = _make_propagate(npad, dpad, tm, tk, compute_dtype)

    cur = emb0.astype(compute_dtype)              # layer-l embeddings (matmul operand)
    acc = jnp.zeros((npad, dpad), jnp.float32)    # f32 sum of hop-1..hop-L embeddings
    for _ in range(n_layers):
        cur, acc = propagate(adj, cur, acc)

    light_out = (emb0[:n, :d] + acc[:n, :d]) * (1.0 / float(n_layers + 1))
    return light_out[:num_users], light_out[num_users:]


def _reference(users_emb, items_emb, graph, n_layers):
    all_emb = jnp.concatenate([users_emb, items_emb], axis=0).astype(jnp.float32)
    g = graph.astype(jnp.float32)
    embs = [all_emb]
    for _ in range(n_layers):
        all_emb = jnp.dot(g, all_emb, precision=jax.lax.Precision.HIGHEST)
        embs.append(all_emb)
    light_out = jnp.mean(jnp.stack(embs, axis=1), axis=1)
    return light_out[: users_emb.shape[0]], light_out[users_emb.shape[0]:]


if __name__ == "__main__":
    n_layers = 3
    num_users, num_items, dim = 24, 37, 48   # N=61, D=48: exercises row + lane padding
    n = num_users + num_items

    key = jax.random.PRNGKey(0)
    k_u, k_i, k_g = jax.random.split(key, 3)

    users_emb = jax.random.normal(k_u, (num_users, dim), dtype=jnp.float32)
    items_emb = jax.random.normal(k_i, (num_items, dim), dtype=jnp.float32)

    # Symmetric-normalized bipartite adjacency (LightGCN style), dense stand-in
    # for the original torch sparse graph.
    r = jax.random.bernoulli(k_g, p=0.3, shape=(num_users, num_items)).astype(jnp.float32)
    adj = jnp.zeros((n, n), jnp.float32)
    adj = adj.at[:num_users, num_users:].set(r)
    adj = adj.at[num_users:, :num_users].set(r.T)
    deg = jnp.sum(adj, axis=1)
    d_inv_sqrt = jnp.where(deg > 0, 1.0 / jnp.sqrt(jnp.maximum(deg, 1e-12)), 0.0)
    graph = adj * d_inv_sqrt[:, None] * d_inv_sqrt[None, :]

    users_ref, items_ref = _reference(users_emb, items_emb, graph, n_layers)

    # float32 matmul path.
    u32, i32 = gnn_encoder_adj_mat(users_emb, items_emb, graph,
                                   n_layers=n_layers, compute_dtype=jnp.float32)
    u32, i32 = jax.block_until_ready((u32, i32))
    assert jnp.allclose(u32, users_ref, atol=2e-3, rtol=2e-3)
    assert jnp.allclose(i32, items_ref, atol=2e-3, rtol=2e-3)

    # bfloat16 matmul path (f32 accumulation) -- relaxed tolerance.
    ubf, ibf = gnn_encoder_adj_mat(users_emb, items_emb, graph,
                                   n_layers=n_layers, compute_dtype=jnp.bfloat16)
    ubf, ibf = jax.block_until_ready((ubf, ibf))
    assert jnp.allclose(ubf, users_ref, atol=3e-2, rtol=3e-2)
    assert jnp.allclose(ibf, items_ref, atol=3e-2, rtol=3e-2)

    print("KERNEL_OK")
</pallas_src>

<mosaic_0001>
module attributes {stable_mosaic.version = 11 : i64} {
  func.func @_propagate_kernel(%arg0: i32, %arg1: i32, %arg2: memref<128x128xf32, #tpu.memory_space<vmem>>, %arg3: memref<128x128xf32, #tpu.memory_space<vmem>>, %arg4: memref<128x128xf32, #tpu.memory_space<vmem>>, %arg5: memref<128x128xf32, #tpu.memory_space<vmem>>, %arg6: memref<128x128xf32, #tpu.memory_space<vmem>>, %arg7: memref<128x128xf32, #tpu.memory_space<vmem>>) attributes {dimension_semantics = [#tpu.dimension_semantics<parallel>, #tpu.dimension_semantics<arbitrary>], iteration_bounds = array<i64: 1, 1>, scalar_prefetch = 0 : i64, scratch_operands = 1 : i64, tpu.core_type = #tpu.core_type<tc>, window_params = [{transform_indices = @transform_0, window_bounds = array<i64: 128, 128>}, {transform_indices = @transform_1, window_bounds = array<i64: 128, 128>}, {transform_indices = @transform_2, window_bounds = array<i64: 128, 128>}, {transform_indices = @transform_3, window_bounds = array<i64: 128, 128>}, {transform_indices = @transform_4, window_bounds = array<i64: 128, 128>}]} {
    %c0_i32 = arith.constant 0 : i32
    %0 = arith.cmpi eq, %arg1, %c0_i32 : i32
    %1 = arith.extui %0 : i1 to i32
    %c0_i32_0 = arith.constant 0 : i32
    %2 = arith.cmpi ne, %1, %c0_i32_0 : i32
    scf.if %2 {
      %cst_10 = arith.constant 0.000000e+00 : f32
      %12 = vector.broadcast %cst_10 : f32 to vector<128x128xf32>
      %c0_11 = arith.constant 0 : index
      %c0_12 = arith.constant 0 : index
      %13 = vector.load %arg7[%c0_11, %c0_12] : memref<128x128xf32, #tpu.memory_space<vmem>>, vector<128x128xf32>
      tpu.vector_store %arg7[%c0_11, %c0_12], %12 {strides = array<i32>} : memref<128x128xf32, #tpu.memory_space<vmem>>, vector<128x128xf32>,
    } else {
    }
    %c0 = arith.constant 0 : index
    %c0_1 = arith.constant 0 : index
    %3 = vector.load %arg7[%c0, %c0_1] : memref<128x128xf32, #tpu.memory_space<vmem>>, vector<128x128xf32>
    %c0_2 = arith.constant 0 : index
    %c0_3 = arith.constant 0 : index
    %4 = vector.load %arg2[%c0_2, %c0_3] : memref<128x128xf32, #tpu.memory_space<vmem>>, vector<128x128xf32>
    %c0_4 = arith.constant 0 : index
    %c0_5 = arith.constant 0 : index
    %5 = vector.load %arg3[%c0_4, %c0_5] : memref<128x128xf32, #tpu.memory_space<vmem>>, vector<128x128xf32>
    %cst = arith.constant dense<0.000000e+00> : vector<128x128xf32>
    %6 = tpu.matmul %4, %5, %cst {dimension_numbers = #tpu.dot_dimension_numbers<[1], [0], [0], [1], [0, 0, 1, 1], [], []>} : vector<128x128xf32>, vector<128x128xf32>, vector<128x128xf32> -> vector<128x128xf32>
    %7 = arith.addf %3, %6 : vector<128x128xf32>
    %c0_6 = arith.constant 0 : index
    %c0_7 = arith.constant 0 : index
    %8 = vector.load %arg7[%c0_6, %c0_7] : memref<128x128xf32, #tpu.memory_space<vmem>>, vector<128x128xf32>
    tpu.vector_store %arg7[%c0_6, %c0_7], %7 {strides = array<i32>} : memref<128x128xf32, #tpu.memory_space<vmem>>, vector<128x128xf32>,
    %c0_i32_8 = arith.constant 0 : i32
    %9 = arith.cmpi eq, %arg1, %c0_i32_8 : i32
    %10 = arith.extui %9 : i1 to i32
    %c0_i32_9 = arith.constant 0 : i32
    %11 = arith.cmpi ne, %10, %c0_i32_9 : i32
    scf.if %11 {
      %c0_10 = arith.constant 0 : index
      %c0_11 = arith.constant 0 : index
      %12 = vector.load %arg7[%c0_10, %c0_11] : memref<128x128xf32, #tpu.memory_space<vmem>>, vector<128x128xf32>
      %c0_12 = arith.constant 0 : index
      %c0_13 = arith.constant 0 : index
      %13 = vector.load %arg5[%c0_12, %c0_13] : memref<128x128xf32, #tpu.memory_space<vmem>>, vector<128x128xf32>
      tpu.vector_store %arg5[%c0_12, %c0_13], %12 {strides = array<i32>} : memref<128x128xf32, #tpu.memory_space<vmem>>, vector<128x128xf32>,
      %c0_14 = arith.constant 0 : index
      %c0_15 = arith.constant 0 : index
      %14 = vector.load %arg4[%c0_14, %c0_15] : memref<128x128xf32, #tpu.memory_space<vmem>>, vector<128x128xf32>
      %c0_16 = arith.constant 0 : index
      %c0_17 = arith.constant 0 : index
      %15 = vector.load %arg7[%c0_16, %c0_17] : memref<128x128xf32, #tpu.memory_space<vmem>>, vector<128x128xf32>
      %16 = arith.addf %14, %15 : vector<128x128xf32>
      %c0_18 = arith.constant 0 : index
      %c0_19 = arith.constant 0 : index
      %17 = vector.load %arg6[%c0_18, %c0_19] : memref<128x128xf32, #tpu.memory_space<vmem>>, vector<128x128xf32>
      tpu.vector_store %arg6[%c0_18, %c0_19], %16 {strides = array<i32>} : memref<128x128xf32, #tpu.memory_space<vmem>>, vector<128x128xf32>,
    } else {
    }
    return
  }
  func.func @transform_0(%arg0: i32, %arg1: i32) -> (i32, i32) {
    %c0_i32 = arith.constant 0 : i32
    return %arg0, %arg1 : i32, i32
  }
  func.func @transform_1(%arg0: i32, %arg1: i32) -> (i32, i32) {
    %c0_i32 = arith.constant 0 : i32
    %c0_i32_0 = arith.constant 0 : i32
    return %arg1, %c0_i32 : i32, i32
  }
  func.func @transform_2(%arg0: i32, %arg1: i32) -> (i32, i32) {
    %c0_i32 = arith.constant 0 : i32
    %c0_i32_0 = arith.constant 0 : i32
    return %arg0, %c0_i32 : i32, i32
  }
  func.func @transform_3(%arg0: i32, %arg1: i32) -> (i32, i32) {
    %c0_i32 = arith.constant 0 : i32
    %c0_i32_0 = arith.constant 0 : i32
    return %arg0, %c0_i32 : i32, i32
  }
  func.func @transform_4(%arg0: i32, %arg1: i32) -> (i32, i32) {
    %c0_i32 = arith.constant 0 : i32
    %c0_i32_0 = arith.constant 0 : i32
    return %arg0, %c0_i32 : i32, i32
  }
}

module attributes {stable_mosaic.version = 11 : i64} {
  func.func @_propagate_kernel(%arg0: i32, %arg1: i32, %arg2: memref<128x128xf32, #tpu.memory_space<vmem>>, %arg3: memref<128x128xf32, #tpu.memory_space<vmem>>, %arg4: memref<128x128xf32, #tpu.memory_space<vmem>>, %arg5: memref<128x128xf32, #tpu.memory_space<vmem>>, %arg6: memref<128x128xf32, #tpu.memory_space<vmem>>, %arg7: memref<128x128xf32, #tpu.memory_space<vmem>>) attributes {dimension_semantics = [#tpu.dimension_semantics<parallel>, #tpu.dimension_semantics<arbitrary>], iteration_bounds = array<i64: 1, 1>, scalar_prefetch = 0 : i64, scratch_operands = 1 : i64, tpu.core_type = #tpu.core_type<tc>, window_params = [{transform_indices = @transform_0, window_bounds = array<i64: 128, 128>}, {transform_indices = @transform_1, window_bounds = array<i64: 128, 128>}, {transform_indices = @transform_2, window_bounds = array<i64: 128, 128>}, {transform_indices = @transform_3, window_bounds = array<i64: 128, 128>}, {transform_indices = @transform_4, window_bounds = array<i64: 128, 128>}]} {
    %c0_i32 = arith.constant 0 : i32
    %0 = arith.cmpi eq, %arg1, %c0_i32 : i32
    %1 = arith.extui %0 : i1 to i32
    %c0_i32_0 = arith.constant 0 : i32
    %2 = arith.cmpi ne, %1, %c0_i32_0 : i32
    scf.if %2 {
      %cst_10 = arith.constant 0.000000e+00 : f32
      %12 = vector.broadcast %cst_10 : f32 to vector<128x128xf32>
      %c0_11 = arith.constant 0 : index
      %c0_12 = arith.constant 0 : index
      %13 = vector.load %arg7[%c0_11, %c0_12] : memref<128x128xf32, #tpu.memory_space<vmem>>, vector<128x128xf32>
      tpu.vector_store %arg7[%c0_11, %c0_12], %12 {strides = array<i32>} : memref<128x128xf32, #tpu.memory_space<vmem>>, vector<128x128xf32>,
    } else {
    }
    %c0 = arith.constant 0 : index
    %c0_1 = arith.constant 0 : index
    %3 = vector.load %arg7[%c0, %c0_1] : memref<128x128xf32, #tpu.memory_space<vmem>>, vector<128x128xf32>
    %c0_2 = arith.constant 0 : index
    %c0_3 = arith.constant 0 : index
    %4 = vector.load %arg2[%c0_2, %c0_3] : memref<128x128xf32, #tpu.memory_space<vmem>>, vector<128x128xf32>
    %c0_4 = arith.constant 0 : index
    %c0_5 = arith.constant 0 : index
    %5 = vector.load %arg3[%c0_4, %c0_5] : memref<128x128xf32, #tpu.memory_space<vmem>>, vector<128x128xf32>
    %cst = arith.constant dense<0.000000e+00> : vector<128x128xf32>
    %6 = tpu.matmul %4, %5, %cst {dimension_numbers = #tpu.dot_dimension_numbers<[1], [0], [0], [1], [0, 0, 1, 1], [], []>} : vector<128x128xf32>, vector<128x128xf32>, vector<128x128xf32> -> vector<128x128xf32>
    %7 = arith.addf %3, %6 : vector<128x128xf32>
    %c0_6 = arith.constant 0 : index
    %c0_7 = arith.constant 0 : index
    %8 = vector.load %arg7[%c0_6, %c0_7] : memref<128x128xf32, #tpu.memory_space<vmem>>, vector<128x128xf32>
    tpu.vector_store %arg7[%c0_6, %c0_7], %7 {strides = array<i32>} : memref<128x128xf32, #tpu.memory_space<vmem>>, vector<128x128xf32>,
    %c0_i32_8 = arith.constant 0 : i32
    %9 = arith.cmpi eq, %arg1, %c0_i32_8 : i32
    %10 = arith.extui %9 : i1 to i32
    %c0_i32_9 = arith.constant 0 : i32
    %11 = arith.cmpi ne, %10, %c0_i32_9 : i32
    scf.if %11 {
      %c0_10 = arith.constant 0 : index
      %c0_11 = arith.constant 0 : index
      %12 = vector.load %arg7[%c0_10, %c0_11] : memref<128x128xf32, #tpu.memory_space<vmem>>, vector<128x128xf32>
      %c0_12 = arith.constant 0 : index
      %c0_13 = arith.constant 0 : index
      %13 = vector.load %arg5[%c0_12, %c0_13] : memref<128x128xf32, #tpu.memory_space<vmem>>, vector<128x128xf32>
      tpu.vector_store %arg5[%c0_12, %c0_13], %12 {strides = array<i32>} : memref<128x128xf32, #tpu.memory_space<vmem>>, vector<128x128xf32>,
      %c0_14 = arith.constant 0 : index
      %c0_15 = arith.constant 0 : index
      %14 = vector.load %arg4[%c0_14, %c0_15] : memref<128x128xf32, #tpu.memory_space<vmem>>, vector<128x128xf32>
      %c0_16 = arith.constant 0 : index
      %c0_17 = arith.constant 0 : index
      %15 = vector.load %arg7[%c0_16, %c0_17] : memref<128x128xf32, #tpu.memory_space<vmem>>, vector<128x128xf32>
      %16 = arith.addf %14, %15 : vector<128x128xf32>
      %c0_18 = arith.constant 0 : index
      %c0_19 = arith.constant 0 : index
      %17 = vector.load %arg6[%c0_18, %c0_19] : memref<128x128xf32, #tpu.memory_space<vmem>>, vector<128x128xf32>
      tpu.vector_store %arg6[%c0_18, %c0_19], %16 {strides = array<i32>} : memref<128x128xf32, #tpu.memory_space<vmem>>, vector<128x128xf32>,
    } else {
    }
    return
  }
  func.func @transform_0(%arg0: i32, %arg1: i32) -> (i32, i32) {
    %c0_i32 = arith.constant 0 : i32
    return %arg0, %arg1 : i32, i32
  }
  func.func @transform_1(%arg0: i32, %arg1: i32) -> (i32, i32) {
    %c0_i32 = arith.constant 0 : i32
    %c0_i32_0 = arith.constant 0 : i32
    return %arg1, %c0_i32 : i32, i32
  }
  func.func @transform_2(%arg0: i32, %arg1: i32) -> (i32, i32) {
    %c0_i32 = arith.constant 0 : i32
    %c0_i32_0 = arith.constant 0 : i32
    return %arg0, %c0_i32 : i32, i32
  }
  func.func @transform_3(%arg0: i32, %arg1: i32) -> (i32, i32) {
    %c0_i32 = arith.constant 0 : i32
    %c0_i32_0 = arith.constant 0 : i32
    return %arg0, %c0_i32 : i32, i32
  }
  func.func @transform_4(%arg0: i32, %arg1: i32) -> (i32, i32) {
    %c0_i32 = arith.constant 0 : i32
    %c0_i32_0 = arith.constant 0 : i32
    return %arg0, %c0_i32 : i32, i32
  }
}

</mosaic_0001>

<llo_original>
// kernel: gnn_encoder_adj_mat.3
$region0: #{gnn_encoder_adj_mat.3}
  #allocation0 [shape = 'u32[]', space=smem, size = 0x4, offset = 0x4, fixed_abs, tag = 'smem constant byte address 0x4 - core index']
  #allocation1 [shape = 'u32[72,128]{1,0:T(1,128)}', space=vmem, size = 0x9000, scoped, tag = 'internal scratch']
  #allocation2 [shape = 'f32[128,128]{1,0:T(8,128)}', space=vmem, size = 0x10000, scoped, tag = 'scratch operand']
  %s0 = inlined_call_operand.vmem [shape: f32[128,128], index: 0, kind: input, shape index: {}]
  %s1 = inlined_call_operand.vmem [shape: f32[128,128], index: 1, kind: input, shape index: {}]
  %s2 = inlined_call_operand.vmem [shape: f32[128,128], index: 2, kind: input, shape index: {}, may-alias: {2,4}]
  %s3 = inlined_call_operand.vmem [shape: f32[128,128], index: 3, kind: output, shape index: {0}]
  %s4 = inlined_call_operand.vmem [shape: f32[128,128], index: 4, kind: output, shape index: {1}, may-alias: {2,4}]
  %5 = xla_tuple %s3, %s4
  %s6 = sld [smem:[#allocation0]]
  $region38: #{gnn_encoder_adj_mat.3} parent=0
    _
  %s8 = ssub.s32 1, %s6
  %s9 = scalar_select 0, %s8, %s6
  // Predicated region
  $region2: #{gnn_encoder_adj_mat.3} parent=0 // pred_check
    _
  $region3: #{gnn_encoder_adj_mat.3} parent=0 // pred_check_branch
    %11 = sbr.rel (0) target = $region5
  $region4: #{gnn_encoder_adj_mat.3} parent=0 // pred_region
    _
  $region5: #{gnn_encoder_adj_mat.3} parent=0 // pred_fallthru
    _
  // Predicated region
  $region6: #{gnn_encoder_adj_mat.3} parent=0 // pred_check
    _
  $region7: #{gnn_encoder_adj_mat.3} parent=0 // pred_check_branch
    %13 = sbr.rel (0) target = $region9
  $region8: #{gnn_encoder_adj_mat.3} parent=0 // pred_region
    _
  $region9: #{gnn_encoder_adj_mat.3} parent=0 // pred_fallthru
    _
  // Predicated region
  $region10: #{gnn_encoder_adj_mat.3} parent=0 // pred_check
    _
  $region11: #{gnn_encoder_adj_mat.3} parent=0 // pred_check_branch
    %15 = sbr.rel (0) target = $region13
  $region12: #{gnn_encoder_adj_mat.3} parent=0 // pred_region
    _
  $region13: #{gnn_encoder_adj_mat.3} parent=0 // pred_fallthru
    _
  %p16 = scmp.eq.s32.totalorder 0, 0
  // Predicated region
  $region14: #{gnn_encoder_adj_mat.3} parent=0 // pred_check
    %p17 = pneg %p16
  $region15: #{gnn_encoder_adj_mat.3} parent=0 // pred_check_branch
    %19 = sbr.rel (%p17) target = $region17
  $region16: #{gnn_encoder_adj_mat.3} parent=0 // pred_region
    %20 = vst [vmem:[#allocation2] sm:$0xff] 0.0
    %21 = vst [vmem:[#allocation2 + $0x8] sm:$0xff] 0.0
    %22 = vst [vmem:[#allocation2 + $0x10] sm:$0xff] 0.0
    %23 = vst [vmem:[#allocation2 + $0x18] sm:$0xff] 0.0
    %24 = vst [vmem:[#allocation2 + $0x20] sm:$0xff] 0.0
    %25 = vst [vmem:[#allocation2 + $0x28] sm:$0xff] 0.0
    %26 = vst [vmem:[#allocation2 + $0x30] sm:$0xff] 0.0
    %27 = vst [vmem:[#allocation2 + $0x38] sm:$0xff] 0.0
    %28 = vst [vmem:[#allocation2 + $0x40] sm:$0xff] 0.0
    %29 = vst [vmem:[#allocation2 + $0x48] sm:$0xff] 0.0
    %30 = vst [vmem:[#allocation2 + $0x50] sm:$0xff] 0.0
    %31 = vst [vmem:[#allocation2 + $0x58] sm:$0xff] 0.0
    %32 = vst [vmem:[#allocation2 + $0x60] sm:$0xff] 0.0
    %33 = vst [vmem:[#allocation2 + $0x68] sm:$0xff] 0.0
    %34 = vst [vmem:[#allocation2 + $0x70] sm:$0xff] 0.0
    %35 = vst [vmem:[#allocation2 + $0x78] sm:$0xff] 0.0
  $region17: #{gnn_encoder_adj_mat.3} parent=0 // pred_fallthru
    _
  %v36 = vld [vmem:[#allocation2] sm:$0xff]
  %v37 = vld [vmem:[#allocation2 + $0x8] sm:$0xff]
  %v38 = vld [vmem:[#allocation2 + $0x10] sm:$0xff]
  %v39 = vld [vmem:[#allocation2 + $0x18] sm:$0xff]
  %v40 = vld [vmem:[#allocation2 + $0x20] sm:$0xff]
  %v41 = vld [vmem:[#allocation2 + $0x28] sm:$0xff]
  %v42 = vld [vmem:[#allocation2 + $0x30] sm:$0xff]
  %v43 = vld [vmem:[#allocation2 + $0x38] sm:$0xff]
  %v44 = vld [vmem:[#allocation2 + $0x40] sm:$0xff]
  %v45 = vld [vmem:[#allocation2 + $0x48] sm:$0xff]
  %v46 = vld [vmem:[#allocation2 + $0x50] sm:$0xff]
  %v47 = vld [vmem:[#allocation2 + $0x58] sm:$0xff]
  %v48 = vld [vmem:[#allocation2 + $0x60] sm:$0xff]
  %v49 = vld [vmem:[#allocation2 + $0x68] sm:$0xff]
  %v50 = vld [vmem:[#allocation2 + $0x70] sm:$0xff]
  %v51 = vld [vmem:[#allocation2 + $0x78] sm:$0xff]
  %v52 = vld [vmem:[%s0] sm:$0xff]
  %v53 = vld [vmem:[%s0 + $0x8] sm:$0xff]
  %v54 = vld [vmem:[%s0 + $0x10] sm:$0xff]
  %v55 = vld [vmem:[%s0 + $0x18] sm:$0xff]
  %v56 = vld [vmem:[%s0 + $0x20] sm:$0xff]
  %v57 = vld [vmem:[%s0 + $0x28] sm:$0xff]
  %v58 = vld [vmem:[%s0 + $0x30] sm:$0xff]
  %v59 = vld [vmem:[%s0 + $0x38] sm:$0xff]
  %v60 = vld [vmem:[%s0 + $0x40] sm:$0xff]
  %v61 = vld [vmem:[%s0 + $0x48] sm:$0xff]
  %v62 = vld [vmem:[%s0 + $0x50] sm:$0xff]
  %v63 = vld [vmem:[%s0 + $0x58] sm:$0xff]
  %v64 = vld [vmem:[%s0 + $0x60] sm:$0xff]
  %v65 = vld [vmem:[%s0 + $0x68] sm:$0xff]
  %v66 = vld [vmem:[%s0 + $0x70] sm:$0xff]
  %v67 = vld [vmem:[%s0 + $0x78] sm:$0xff]
  %v68 = vld [vmem:[%s1] sm:$0xff]
  %v69 = vld [vmem:[%s1 + $0x8] sm:$0xff]
  %v70 = vld [vmem:[%s1 + $0x10] sm:$0xff]
  %v71 = vld [vmem:[%s1 + $0x18] sm:$0xff]
  %v72 = vld [vmem:[%s1 + $0x20] sm:$0xff]
  %v73 = vld [vmem:[%s1 + $0x28] sm:$0xff]
  %v74 = vld [vmem:[%s1 + $0x30] sm:$0xff]
  %v75 = vld [vmem:[%s1 + $0x38] sm:$0xff]
  %v76 = vld [vmem:[%s1 + $0x40] sm:$0xff]
  %v77 = vld [vmem:[%s1 + $0x48] sm:$0xff]
  %v78 = vld [vmem:[%s1 + $0x50] sm:$0xff]
  %v79 = vld [vmem:[%s1 + $0x58] sm:$0xff]
  %v80 = vld [vmem:[%s1 + $0x60] sm:$0xff]
  %v81 = vld [vmem:[%s1 + $0x68] sm:$0xff]
  %v82 = vld [vmem:[%s1 + $0x70] sm:$0xff]
  %v83 = vld [vmem:[%s1 + $0x78] sm:$0xff]
  %84 = vmatpush.msra.mxu0 %v83
  %85 = vmatpush.msra.mxu0 %v82
  %86 = vmatpush.msra.mxu0 %v81
  %87 = vmatpush.msra.mxu0 %v80
  %88 = vmatpush.msra.mxu0 %v79
  %89 = vmatpush.msra.mxu0 %v78
  %90 = vmatpush.msra.mxu0 %v77
  %91 = vmatpush.msra.mxu0 %v76
  %92 = vmatpush.msra.mxu0 %v75
  %93 = vmatpush.msra.mxu0 %v74
  %94 = vmatpush.msra.mxu0 %v73
  %95 = vmatpush.msra.mxu0 %v72
  %96 = vmatpush.msra.mxu0 %v71
  %97 = vmatpush.msra.mxu0 %v70
  %98 = vmatpush.msra.mxu0 %v69
  %99 = vmatpush.msra.mxu0 %v68
  %100 = vmatmul.f32.gmra.mxu0 %v52
  %v101 = vpop.f32.mrf.mxu0
  %v102 = vadd.f32 0.0, %v101
  %103 = vmatmul.f32.gmra.mxu0 %v53
  %v104 = vpop.f32.mrf.mxu0
  %v105 = vadd.f32 0.0, %v104
  %106 = vmatmul.f32.gmra.mxu0 %v54
  %v107 = vpop.f32.mrf.mxu0
  %v108 = vadd.f32 0.0, %v107
  %109 = vmatmul.f32.gmra.mxu0 %v55
  %v110 = vpop.f32.mrf.mxu0
  %v111 = vadd.f32 0.0, %v110
  %112 = vmatmul.f32.gmra.mxu0 %v56
  %v113 = vpop.f32.mrf.mxu0
  %v114 = vadd.f32 0.0, %v113
  %115 = vmatmul.f32.gmra.mxu0 %v57
  %v116 = vpop.f32.mrf.mxu0
  %v117 = vadd.f32 0.0, %v116
  %118 = vmatmul.f32.gmra.mxu0 %v58
  %v119 = vpop.f32.mrf.mxu0
  %v120 = vadd.f32 0.0, %v119
  %121 = vmatmul.f32.gmra.mxu0 %v59
  %v122 = vpop.f32.mrf.mxu0
  %v123 = vadd.f32 0.0, %v122
  %124 = vmatmul.f32.gmra.mxu0 %v60
  %v125 = vpop.f32.mrf.mxu0
  %v126 = vadd.f32 0.0, %v125
  %127 = vmatmul.f32.gmra.mxu0 %v61
  %v128 = vpop.f32.mrf.mxu0
  %v129 = vadd.f32 0.0, %v128
  %130 = vmatmul.f32.gmra.mxu0 %v62
  %v131 = vpop.f32.mrf.mxu0
  %v132 = vadd.f32 0.0, %v131
  %133 = vmatmul.f32.gmra.mxu0 %v63
  %v134 = vpop.f32.mrf.mxu0
  %v135 = vadd.f32 0.0, %v134
  %136 = vmatmul.f32.gmra.mxu0 %v64
  %v137 = vpop.f32.mrf.mxu0
  %v138 = vadd.f32 0.0, %v137
  %139 = vmatmul.f32.gmra.mxu0 %v65
  %v140 = vpop.f32.mrf.mxu0
  %v141 = vadd.f32 0.0, %v140
  %142 = vmatmul.f32.gmra.mxu0 %v66
  %v143 = vpop.f32.mrf.mxu0
  %v144 = vadd.f32 0.0, %v143
  %145 = vmatmul.f32.gmra.mxu0 %v67
  %v146 = vpop.f32.mrf.mxu0
  %v147 = vadd.f32 0.0, %v146
  %148 = vdwg.mxu0
  %v149 = vadd.f32 %v36, %v102
  %v150 = vadd.f32 %v37, %v105
  %v151 = vadd.f32 %v38, %v108
  %v152 = vadd.f32 %v39, %v111
  %v153 = vadd.f32 %v40, %v114
  %v154 = vadd.f32 %v41, %v117
  %v155 = vadd.f32 %v42, %v120
  %v156 = vadd.f32 %v43, %v123
  %v157 = vadd.f32 %v44, %v126
  %v158 = vadd.f32 %v45, %v129
  %v159 = vadd.f32 %v46, %v132
  %v160 = vadd.f32 %v47, %v135
  %v161 = vadd.f32 %v48, %v138
  %v162 = vadd.f32 %v49, %v141
  %v163 = vadd.f32 %v50, %v144
  %v164 = vadd.f32 %v51, %v147
  %165 = vst [vmem:[#allocation2] sm:$0xff] %v149
  %166 = vst [vmem:[#allocation2 + $0x8] sm:$0xff] %v150
  %167 = vst [vmem:[#allocation2 + $0x10] sm:$0xff] %v151
  %168 = vst [vmem:[#allocation2 + $0x18] sm:$0xff] %v152
  %169 = vst [vmem:[#allocation2 + $0x20] sm:$0xff] %v153
  %170 = vst [vmem:[#allocation2 + $0x28] sm:$0xff] %v154
  %171 = vst [vmem:[#allocation2 + $0x30] sm:$0xff] %v155
  %172 = vst [vmem:[#allocation2 + $0x38] sm:$0xff] %v156
  %173 = vst [vmem:[#allocation2 + $0x40] sm:$0xff] %v157
  %174 = vst [vmem:[#allocation2 + $0x48] sm:$0xff] %v158
  %175 = vst [vmem:[#allocation2 + $0x50] sm:$0xff] %v159
  %176 = vst [vmem:[#allocation2 + $0x58] sm:$0xff] %v160
  %177 = vst [vmem:[#allocation2 + $0x60] sm:$0xff] %v161
  %178 = vst [vmem:[#allocation2 + $0x68] sm:$0xff] %v162
  %179 = vst [vmem:[#allocation2 + $0x70] sm:$0xff] %v163
  %180 = vst [vmem:[#allocation2 + $0x78] sm:$0xff] %v164
  // Predicated region
  $region18: #{gnn_encoder_adj_mat.3} parent=0 // pred_check
    %p181 = pneg %p16
  $region19: #{gnn_encoder_adj_mat.3} parent=0 // pred_check_branch
    %183 = sbr.rel (%p181) target = $region21
  $region20: #{gnn_encoder_adj_mat.3} parent=0 // pred_region
    %v184 = vld [vmem:[#allocation2] sm:$0xff]
    %v185 = vld [vmem:[#allocation2 + $0x8] sm:$0xff]
    %v186 = vld [vmem:[#allocation2 + $0x10] sm:$0xff]
    %v187 = vld [vmem:[#allocation2 + $0x18] sm:$0xff]
    %v188 = vld [vmem:[#allocation2 + $0x20] sm:$0xff]
    %v189 = vld [vmem:[#allocation2 + $0x28] sm:$0xff]
    %v190 = vld [vmem:[#allocation2 + $0x30] sm:$0xff]
    %v191 = vld [vmem:[#allocation2 + $0x38] sm:$0xff]
    %v192 = vld [vmem:[#allocation2 + $0x40] sm:$0xff]
    %v193 = vld [vmem:[#allocation2 + $0x48] sm:$0xff]
    %v194 = vld [vmem:[#allocation2 + $0x50] sm:$0xff]
    %v195 = vld [vmem:[#allocation2 + $0x58] sm:$0xff]
    %v196 = vld [vmem:[#allocation2 + $0x60] sm:$0xff]
    %v197 = vld [vmem:[#allocation2 + $0x68] sm:$0xff]
    %v198 = vld [vmem:[#allocation2 + $0x70] sm:$0xff]
    %v199 = vld [vmem:[#allocation2 + $0x78] sm:$0xff]
    %200 = vst [vmem:[%s3] sm:$0xff] %v184
    %201 = vst [vmem:[%s3 + $0x8] sm:$0xff] %v185
    %202 = vst [vmem:[%s3 + $0x10] sm:$0xff] %v186
    %203 = vst [vmem:[%s3 + $0x18] sm:$0xff] %v187
    %204 = vst [vmem:[%s3 + $0x20] sm:$0xff] %v188
    %205 = vst [vmem:[%s3 + $0x28] sm:$0xff] %v189
    %206 = vst [vmem:[%s3 + $0x30] sm:$0xff] %v190
    %207 = vst [vmem:[%s3 + $0x38] sm:$0xff] %v191
    %208 = vst [vmem:[%s3 + $0x40] sm:$0xff] %v192
    %209 = vst [vmem:[%s3 + $0x48] sm:$0xff] %v193
    %210 = vst [vmem:[%s3 + $0x50] sm:$0xff] %v194
    %211 = vst [vmem:[%s3 + $0x58] sm:$0xff] %v195
    %212 = vst [vmem:[%s3 + $0x60] sm:$0xff] %v196
    %213 = vst [vmem:[%s3 + $0x68] sm:$0xff] %v197
    %214 = vst [vmem:[%s3 + $0x70] sm:$0xff] %v198
    %215 = vst [vmem:[%s3 + $0x78] sm:$0xff] %v199
    %v216 = vld [vmem:[%s2] sm:$0xff]
    %v217 = vld [vmem:[%s2 + $0x8] sm:$0xff]
    %v218 = vld [vmem:[%s2 + $0x10] sm:$0xff]
    %v219 = vld [vmem:[%s2 + $0x18] sm:$0xff]
    %v220 = vld [vmem:[%s2 + $0x20] sm:$0xff]
    %v221 = vld [vmem:[%s2 + $0x28] sm:$0xff]
    %v222 = vld [vmem:[%s2 + $0x30] sm:$0xff]
    %v223 = vld [vmem:[%s2 + $0x38] sm:$0xff]
    %v224 = vld [vmem:[%s2 + $0x40] sm:$0xff]
    %v225 = vld [vmem:[%s2 + $0x48] sm:$0xff]
    %v226 = vld [vmem:[%s2 + $0x50] sm:$0xff]
    %v227 = vld [vmem:[%s2 + $0x58] sm:$0xff]
    %v228 = vld [vmem:[%s2 + $0x60] sm:$0xff]
    %v229 = vld [vmem:[%s2 + $0x68] sm:$0xff]
    %v230 = vld [vmem:[%s2 + $0x70] sm:$0xff]
    %v231 = vld [vmem:[%s2 + $0x78] sm:$0xff]
    %v232 = vld [vmem:[#allocation2] sm:$0xff]
    %v233 = vld [vmem:[#allocation2 + $0x8] sm:$0xff]
    %v234 = vld [vmem:[#allocation2 + $0x10] sm:$0xff]
    %v235 = vld [vmem:[#allocation2 + $0x18] sm:$0xff]
    %v236 = vld [vmem:[#allocation2 + $0x20] sm:$0xff]
    %v237 = vld [vmem:[#allocation2 + $0x28] sm:$0xff]
    %v238 = vld [vmem:[#allocation2 + $0x30] sm:$0xff]
    %v239 = vld [vmem:[#allocation2 + $0x38] sm:$0xff]
    %v240 = vld [vmem:[#allocation2 + $0x40] sm:$0xff]
    %v241 = vld [vmem:[#allocation2 + $0x48] sm:$0xff]
    %v242 = vld [vmem:[#allocation2 + $0x50] sm:$0xff]
    %v243 = vld [vmem:[#allocation2 + $0x58] sm:$0xff]
    %v244 = vld [vmem:[#allocation2 + $0x60] sm:$0xff]
    %v245 = vld [vmem:[#allocation2 + $0x68] sm:$0xff]
    %v246 = vld [vmem:[#allocation2 + $0x70] sm:$0xff]
    %v247 = vld [vmem:[#allocation2 + $0x78] sm:$0xff]
    %v248 = vadd.f32 %v216, %v232
    %v249 = vadd.f32 %v217, %v233
    %v250 = vadd.f32 %v218, %v234
    %v251 = vadd.f32 %v219, %v235
    %v252 = vadd.f32 %v220, %v236
    %v253 = vadd.f32 %v221, %v237
    %v254 = vadd.f32 %v222, %v238
    %v255 = vadd.f32 %v223, %v239
    %v256 = vadd.f32 %v224, %v240
    %v257 = vadd.f32 %v225, %v241
    %v258 = vadd.f32 %v226, %v242
    %v259 = vadd.f32 %v227, %v243
    %v260 = vadd.f32 %v228, %v244
    %v261 = vadd.f32 %v229, %v245
    %v262 = vadd.f32 %v230, %v246
    %v263 = vadd.f32 %v231, %v247
    %264 = vst [vmem:[%s4] sm:$0xff] %v248
    %265 = vst [vmem:[%s4 + $0x8] sm:$0xff] %v249
    %266 = vst [vmem:[%s4 + $0x10] sm:$0xff] %v250
    %267 = vst [vmem:[%s4 + $0x18] sm:$0xff] %v251
    %268 = vst [vmem:[%s4 + $0x20] sm:$0xff] %v252
    %269 = vst [vmem:[%s4 + $0x28] sm:$0xff] %v253
    %270 = vst [vmem:[%s4 + $0x30] sm:$0xff] %v254
    %271 = vst [vmem:[%s4 + $0x38] sm:$0xff] %v255
    %272 = vst [vmem:[%s4 + $0x40] sm:$0xff] %v256
    %273 = vst [vmem:[%s4 + $0x48] sm:$0xff] %v257
    %274 = vst [vmem:[%s4 + $0x50] sm:$0xff] %v258
    %275 = vst [vmem:[%s4 + $0x58] sm:$0xff] %v259
    %276 = vst [vmem:[%s4 + $0x60] sm:$0xff] %v260
    %277 = vst [vmem:[%s4 + $0x68] sm:$0xff] %v261
    %278 = vst [vmem:[%s4 + $0x70] sm:$0xff] %v262
    %279 = vst [vmem:[%s4 + $0x78] sm:$0xff] %v263
  $region21: #{gnn_encoder_adj_mat.3} parent=0 // pred_fallthru
    _
  // Predicated region
  $region22: #{gnn_encoder_adj_mat.3} parent=0 // pred_check
    _
  $region23: #{gnn_encoder_adj_mat.3} parent=0 // pred_check_branch
    %281 = sbr.rel (0) target = $region25
  $region24: #{gnn_encoder_adj_mat.3} parent=0 // pred_region
    _
  $region25: #{gnn_encoder_adj_mat.3} parent=0 // pred_fallthru
    _
  // Predicated region
  $region26: #{gnn_encoder_adj_mat.3} parent=0 // pred_check
    _
  $region27: #{gnn_encoder_adj_mat.3} parent=0 // pred_check_branch
    %283 = sbr.rel (0) target = $region29
  $region28: #{gnn_encoder_adj_mat.3} parent=0 // pred_region
    _
  $region29: #{gnn_encoder_adj_mat.3} parent=0 // pred_fallthru
    _
  // Predicated region
  $region30: #{gnn_encoder_adj_mat.3} parent=0 // pred_check
    _
  $region31: #{gnn_encoder_adj_mat.3} parent=0 // pred_check_branch
    %285 = sbr.rel (0) target = $region33
  $region32: #{gnn_encoder_adj_mat.3} parent=0 // pred_region
    _
  $region33: #{gnn_encoder_adj_mat.3} parent=0 // pred_fallthru
    _
  // Predicated region
  $region34: #{gnn_encoder_adj_mat.3} parent=0 // pred_check
    _
  $region35: #{gnn_encoder_adj_mat.3} parent=0 // pred_check_branch
    %287 = sbr.rel (0) target = $region37
  $region36: #{gnn_encoder_adj_mat.3} parent=0 // pred_region
    _
  $region37: #{gnn_encoder_adj_mat.3} parent=0 // pred_fallthru
    _

// kernel: gnn_encoder_adj_mat.5
$region0: #{gnn_encoder_adj_mat.5}
  #allocation0 [shape = 'u32[]', space=smem, size = 0x4, offset = 0x4, fixed_abs, tag = 'smem constant byte address 0x4 - core index']
  #allocation1 [shape = 'u32[72,128]{1,0:T(1,128)}', space=vmem, size = 0x9000, scoped, tag = 'internal scratch']
  #allocation2 [shape = 'f32[128,128]{1,0:T(8,128)}', space=vmem, size = 0x10000, scoped, tag = 'scratch operand']
  %s0 = inlined_call_operand.vmem [shape: f32[128,128], index: 0, kind: input, shape index: {}]
  %s1 = inlined_call_operand.vmem [shape: f32[128,128], index: 1, kind: input, shape index: {}]
  %s2 = inlined_call_operand.vmem [shape: f32[128,128], index: 2, kind: input, shape index: {}, may-alias: {2,4}]
  %s3 = inlined_call_operand.hbm [shape: f32[128,128], index: 3, kind: output, shape index: {0}]
  %s4 = inlined_call_operand.vmem [shape: f32[128,128], index: 4, kind: output, shape index: {1}, may-alias: {2,4}]
  %5 = xla_tuple %s3, %s4
  %s6 = sld [smem:[#allocation0]]
  $region38: #{gnn_encoder_adj_mat.5} parent=0
    _
  %s8 = ssub.s32 1, %s6
  %s9 = scalar_select 0, %s8, %s6
  $region1: #{gnn_encoder_adj_mat.5} parent=0
    #allocation3 [shape = 'u8[65536]{0}', space=vmem, size = 0x10000, scoped, tag = 'output window, operand 0, single buffered']
    #allocation4 [shape = 's32[1]{0}', space=sflag, size = 0x4, scoped, tag = 'scoped memory for gnn_encoder_adj_mat.5']
    %10 = vsyncpa [#allocation4], 0
    // Predicated region
    $region2: #{gnn_encoder_adj_mat.5} parent=1 // pred_check
      _
    $region3: #{gnn_encoder_adj_mat.5} parent=1 // pred_check_branch
      %12 = sbr.rel (0) target = $region5
    $region4: #{gnn_encoder_adj_mat.5} parent=1 // pred_region
      _
    $region5: #{gnn_encoder_adj_mat.5} parent=1 // pred_fallthru
      _
    // Predicated region
    $region6: #{gnn_encoder_adj_mat.5} parent=1 // pred_check
      _
    $region7: #{gnn_encoder_adj_mat.5} parent=1 // pred_check_branch
      %14 = sbr.rel (0) target = $region9
    $region8: #{gnn_encoder_adj_mat.5} parent=1 // pred_region
      _
    $region9: #{gnn_encoder_adj_mat.5} parent=1 // pred_fallthru
      _
    // Predicated region
    $region10: #{gnn_encoder_adj_mat.5} parent=1 // pred_check
      _
    $region11: #{gnn_encoder_adj_mat.5} parent=1 // pred_check_branch
      %16 = sbr.rel (0) target = $region13
    $region12: #{gnn_encoder_adj_mat.5} parent=1 // pred_region
      _
    $region13: #{gnn_encoder_adj_mat.5} parent=1 // pred_fallthru
      _
    %p17 = scmp.eq.s32.totalorder 0, 0
    // Predicated region
    $region14: #{gnn_encoder_adj_mat.5} parent=1 // pred_check
      %p18 = pneg %p17
    $region15: #{gnn_encoder_adj_mat.5} parent=1 // pred_check_branch
      %20 = sbr.rel (%p18) target = $region17
    $region16: #{gnn_encoder_adj_mat.5} parent=1 // pred_region
      %21 = vst [vmem:[#allocation2] sm:$0xff] 0.0
      %22 = vst [vmem:[#allocation2 + $0x8] sm:$0xff] 0.0
      %23 = vst [vmem:[#allocation2 + $0x10] sm:$0xff] 0.0
      %24 = vst [vmem:[#allocation2 + $0x18] sm:$0xff] 0.0
      %25 = vst [vmem:[#allocation2 + $0x20] sm:$0xff] 0.0
      %26 = vst [vmem:[#allocation2 + $0x28] sm:$0xff] 0.0
      %27 = vst [vmem:[#allocation2 + $0x30] sm:$0xff] 0.0
      %28 = vst [vmem:[#allocation2 + $0x38] sm:$0xff] 0.0
      %29 = vst [vmem:[#allocation2 + $0x40] sm:$0xff] 0.0
      %30 = vst [vmem:[#allocation2 + $0x48] sm:$0xff] 0.0
      %31 = vst [vmem:[#allocation2 + $0x50] sm:$0xff] 0.0
      %32 = vst [vmem:[#allocation2 + $0x58] sm:$0xff] 0.0
      %33 = vst [vmem:[#allocation2 + $0x60] sm:$0xff] 0.0
      %34 = vst [vmem:[#allocation2 + $0x68] sm:$0xff] 0.0
      %35 = vst [vmem:[#allocation2 + $0x70] sm:$0xff] 0.0
      %36 = vst [vmem:[#allocation2 + $0x78] sm:$0xff] 0.0
    $region17: #{gnn_encoder_adj_mat.5} parent=1 // pred_fallthru
      _
    %v37 = vld [vmem:[#allocation2] sm:$0xff]
    %v38 = vld [vmem:[#allocation2 + $0x8] sm:$0xff]
    %v39 = vld [vmem:[#allocation2 + $0x10] sm:$0xff]
    %v40 = vld [vmem:[#allocation2 + $0x18] sm:$0xff]
    %v41 = vld [vmem:[#allocation2 + $0x20] sm:$0xff]
    %v42 = vld [vmem:[#allocation2 + $0x28] sm:$0xff]
    %v43 = vld [vmem:[#allocation2 + $0x30] sm:$0xff]
    %v44 = vld [vmem:[#allocation2 + $0x38] sm:$0xff]
    %v45 = vld [vmem:[#allocation2 + $0x40] sm:$0xff]
    %v46 = vld [vmem:[#allocation2 + $0x48] sm:$0xff]
    %v47 = vld [vmem:[#allocation2 + $0x50] sm:$0xff]
    %v48 = vld [vmem:[#allocation2 + $0x58] sm:$0xff]
    %v49 = vld [vmem:[#allocation2 + $0x60] sm:$0xff]
    %v50 = vld [vmem:[#allocation2 + $0x68] sm:$0xff]
    %v51 = vld [vmem:[#allocation2 + $0x70] sm:$0xff]
    %v52 = vld [vmem:[#allocation2 + $0x78] sm:$0xff]
    %v53 = vld [vmem:[%s0] sm:$0xff]
    %v54 = vld [vmem:[%s0 + $0x8] sm:$0xff]
    %v55 = vld [vmem:[%s0 + $0x10] sm:$0xff]
    %v56 = vld [vmem:[%s0 + $0x18] sm:$0xff]
    %v57 = vld [vmem:[%s0 + $0x20] sm:$0xff]
    %v58 = vld [vmem:[%s0 + $0x28] sm:$0xff]
    %v59 = vld [vmem:[%s0 + $0x30] sm:$0xff]
    %v60 = vld [vmem:[%s0 + $0x38] sm:$0xff]
    %v61 = vld [vmem:[%s0 + $0x40] sm:$0xff]
    %v62 = vld [vmem:[%s0 + $0x48] sm:$0xff]
    %v63 = vld [vmem:[%s0 + $0x50] sm:$0xff]
    %v64 = vld [vmem:[%s0 + $0x58] sm:$0xff]
    %v65 = vld [vmem:[%s0 + $0x60] sm:$0xff]
    %v66 = vld [vmem:[%s0 + $0x68] sm:$0xff]
    %v67 = vld [vmem:[%s0 + $0x70] sm:$0xff]
    %v68 = vld [vmem:[%s0 + $0x78] sm:$0xff]
    %v69 = vld [vmem:[%s1] sm:$0xff]
    %v70 = vld [vmem:[%s1 + $0x8] sm:$0xff]
    %v71 = vld [vmem:[%s1 + $0x10] sm:$0xff]
    %v72 = vld [vmem:[%s1 + $0x18] sm:$0xff]
    %v73 = vld [vmem:[%s1 + $0x20] sm:$0xff]
    %v74 = vld [vmem:[%s1 + $0x28] sm:$0xff]
    %v75 = vld [vmem:[%s1 + $0x30] sm:$0xff]
    %v76 = vld [vmem:[%s1 + $0x38] sm:$0xff]
    %v77 = vld [vmem:[%s1 + $0x40] sm:$0xff]
    %v78 = vld [vmem:[%s1 + $0x48] sm:$0xff]
    %v79 = vld [vmem:[%s1 + $0x50] sm:$0xff]
    %v80 = vld [vmem:[%s1 + $0x58] sm:$0xff]
    %v81 = vld [vmem:[%s1 + $0x60] sm:$0xff]
    %v82 = vld [vmem:[%s1 + $0x68] sm:$0xff]
    %v83 = vld [vmem:[%s1 + $0x70] sm:$0xff]
    %v84 = vld [vmem:[%s1 + $0x78] sm:$0xff]
    %85 = vmatpush.msra.mxu0 %v84
    %86 = vmatpush.msra.mxu0 %v83
    %87 = vmatpush.msra.mxu0 %v82
    %88 = vmatpush.msra.mxu0 %v81
    %89 = vmatpush.msra.mxu0 %v80
    %90 = vmatpush.msra.mxu0 %v79
    %91 = vmatpush.msra.mxu0 %v78
    %92 = vmatpush.msra.mxu0 %v77
    %93 = vmatpush.msra.mxu0 %v76
    %94 = vmatpush.msra.mxu0 %v75
    %95 = vmatpush.msra.mxu0 %v74
    %96 = vmatpush.msra.mxu0 %v73
    %97 = vmatpush.msra.mxu0 %v72
    %98 = vmatpush.msra.mxu0 %v71
    %99 = vmatpush.msra.mxu0 %v70
    %100 = vmatpush.msra.mxu0 %v69
    %101 = vmatmul.f32.gmra.mxu0 %v53
    %v102 = vpop.f32.mrf.mxu0
    %v103 = vadd.f32 0.0, %v102
    %104 = vmatmul.f32.gmra.mxu0 %v54
    %v105 = vpop.f32.mrf.mxu0
    %v106 = vadd.f32 0.0, %v105
    %107 = vmatmul.f32.gmra.mxu0 %v55
    %v108 = vpop.f32.mrf.mxu0
    %v109 = vadd.f32 0.0, %v108
    %110 = vmatmul.f32.gmra.mxu0 %v56
    %v111 = vpop.f32.mrf.mxu0
    %v112 = vadd.f32 0.0, %v111
    %113 = vmatmul.f32.gmra.mxu0 %v57
    %v114 = vpop.f32.mrf.mxu0
    %v115 = vadd.f32 0.0, %v114
    %116 = vmatmul.f32.gmra.mxu0 %v58
    %v117 = vpop.f32.mrf.mxu0
    %v118 = vadd.f32 0.0, %v117
    %119 = vmatmul.f32.gmra.mxu0 %v59
    %v120 = vpop.f32.mrf.mxu0
    %v121 = vadd.f32 0.0, %v120
    %122 = vmatmul.f32.gmra.mxu0 %v60
    %v123 = vpop.f32.mrf.mxu0
    %v124 = vadd.f32 0.0, %v123
    %125 = vmatmul.f32.gmra.mxu0 %v61
    %v126 = vpop.f32.mrf.mxu0
    %v127 = vadd.f32 0.0, %v126
    %128 = vmatmul.f32.gmra.mxu0 %v62
    %v129 = vpop.f32.mrf.mxu0
    %v130 = vadd.f32 0.0, %v129
    %131 = vmatmul.f32.gmra.mxu0 %v63
    %v132 = vpop.f32.mrf.mxu0
    %v133 = vadd.f32 0.0, %v132
    %134 = vmatmul.f32.gmra.mxu0 %v64
    %v135 = vpop.f32.mrf.mxu0
    %v136 = vadd.f32 0.0, %v135
    %137 = vmatmul.f32.gmra.mxu0 %v65
    %v138 = vpop.f32.mrf.mxu0
    %v139 = vadd.f32 0.0, %v138
    %140 = vmatmul.f32.gmra.mxu0 %v66
    %v141 = vpop.f32.mrf.mxu0
    %v142 = vadd.f32 0.0, %v141
    %143 = vmatmul.f32.gmra.mxu0 %v67
    %v144 = vpop.f32.mrf.mxu0
    %v145 = vadd.f32 0.0, %v144
    %146 = vmatmul.f32.gmra.mxu0 %v68
    %v147 = vpop.f32.mrf.mxu0
    %v148 = vadd.f32 0.0, %v147
    %149 = vdwg.mxu0
    %v150 = vadd.f32 %v37, %v103
    %v151 = vadd.f32 %v38, %v106
    %v152 = vadd.f32 %v39, %v109
    %v153 = vadd.f32 %v40, %v112
    %v154 = vadd.f32 %v41, %v115
    %v155 = vadd.f32 %v42, %v118
    %v156 = vadd.f32 %v43, %v121
    %v157 = vadd.f32 %v44, %v124
    %v158 = vadd.f32 %v45, %v127
    %v159 = vadd.f32 %v46, %v130
    %v160 = vadd.f32 %v47, %v133
    %v161 = vadd.f32 %v48, %v136
    %v162 = vadd.f32 %v49, %v139
    %v163 = vadd.f32 %v50, %v142
    %v164 = vadd.f32 %v51, %v145
    %v165 = vadd.f32 %v52, %v148
    %166 = vst [vmem:[#allocation2] sm:$0xff] %v150
    %167 = vst [vmem:[#allocation2 + $0x8] sm:$0xff] %v151
    %168 = vst [vmem:[#allocation2 + $0x10] sm:$0xff] %v152
    %169 = vst [vmem:[#allocation2 + $0x18] sm:$0xff] %v153
    %170 = vst [vmem:[#allocation2 + $0x20] sm:$0xff] %v154
    %171 = vst [vmem:[#allocation2 + $0x28] sm:$0xff] %v155
    %172 = vst [vmem:[#allocation2 + $0x30] sm:$0xff] %v156
    %173 = vst [vmem:[#allocation2 + $0x38] sm:$0xff] %v157
    %174 = vst [vmem:[#allocation2 + $0x40] sm:$0xff] %v158
    %175 = vst [vmem:[#allocation2 + $0x48] sm:$0xff] %v159
    %176 = vst [vmem:[#allocation2 + $0x50] sm:$0xff] %v160
    %177 = vst [vmem:[#allocation2 + $0x58] sm:$0xff] %v161
    %178 = vst [vmem:[#allocation2 + $0x60] sm:$0xff] %v162
    %179 = vst [vmem:[#allocation2 + $0x68] sm:$0xff] %v163
    %180 = vst [vmem:[#allocation2 + $0x70] sm:$0xff] %v164
    %181 = vst [vmem:[#allocation2 + $0x78] sm:$0xff] %v165
    // Predicated region
    $region18: #{gnn_encoder_adj_mat.5} parent=1 // pred_check
      %p182 = pneg %p17
    $region19: #{gnn_encoder_adj_mat.5} parent=1 // pred_check_branch
      %184 = sbr.rel (%p182) target = $region21
    $region20: #{gnn_encoder_adj_mat.5} parent=1 // pred_region
      %v185 = vld [vmem:[#allocation2] sm:$0xff]
      %v186 = vld [vmem:[#allocation2 + $0x8] sm:$0xff]
      %v187 = vld [vmem:[#allocation2 + $0x10] sm:$0xff]
      %v188 = vld [vmem:[#allocation2 + $0x18] sm:$0xff]
      %v189 = vld [vmem:[#allocation2 + $0x20] sm:$0xff]
      %v190 = vld [vmem:[#allocation2 + $0x28] sm:$0xff]
      %v191 = vld [vmem:[#allocation2 + $0x30] sm:$0xff]
      %v192 = vld [vmem:[#allocation2 + $0x38] sm:$0xff]
      %v193 = vld [vmem:[#allocation2 + $0x40] sm:$0xff]
      %v194 = vld [vmem:[#allocation2 + $0x48] sm:$0xff]
      %v195 = vld [vmem:[#allocation2 + $0x50] sm:$0xff]
      %v196 = vld [vmem:[#allocation2 + $0x58] sm:$0xff]
      %v197 = vld [vmem:[#allocation2 + $0x60] sm:$0xff]
      %v198 = vld [vmem:[#allocation2 + $0x68] sm:$0xff]
      %v199 = vld [vmem:[#allocation2 + $0x70] sm:$0xff]
      %v200 = vld [vmem:[#allocation2 + $0x78] sm:$0xff]
      %201 = vst [vmem:[#allocation3] sm:$0xff] %v185
      %202 = vst [vmem:[#allocation3 + $0x8] sm:$0xff] %v186
      %203 = vst [vmem:[#allocation3 + $0x10] sm:$0xff] %v187
      %204 = vst [vmem:[#allocation3 + $0x18] sm:$0xff] %v188
      %205 = vst [vmem:[#allocation3 + $0x20] sm:$0xff] %v189
      %206 = vst [vmem:[#allocation3 + $0x28] sm:$0xff] %v190
      %207 = vst [vmem:[#allocation3 + $0x30] sm:$0xff] %v191
      %208 = vst [vmem:[#allocation3 + $0x38] sm:$0xff] %v192
      %209 = vst [vmem:[#allocation3 + $0x40] sm:$0xff] %v193
      %210 = vst [vmem:[#allocation3 + $0x48] sm:$0xff] %v194
      %211 = vst [vmem:[#allocation3 + $0x50] sm:$0xff] %v195
      %212 = vst [vmem:[#allocation3 + $0x58] sm:$0xff] %v196
      %213 = vst [vmem:[#allocation3 + $0x60] sm:$0xff] %v197
      %214 = vst [vmem:[#allocation3 + $0x68] sm:$0xff] %v198
      %215 = vst [vmem:[#allocation3 + $0x70] sm:$0xff] %v199
      %216 = vst [vmem:[#allocation3 + $0x78] sm:$0xff] %v200
      %v217 = vld [vmem:[%s2] sm:$0xff]
      %v218 = vld [vmem:[%s2 + $0x8] sm:$0xff]
      %v219 = vld [vmem:[%s2 + $0x10] sm:$0xff]
      %v220 = vld [vmem:[%s2 + $0x18] sm:$0xff]
      %v221 = vld [vmem:[%s2 + $0x20] sm:$0xff]
      %v222 = vld [vmem:[%s2 + $0x28] sm:$0xff]
      %v223 = vld [vmem:[%s2 + $0x30] sm:$0xff]
      %v224 = vld [vmem:[%s2 + $0x38] sm:$0xff]
      %v225 = vld [vmem:[%s2 + $0x40] sm:$0xff]
      %v226 = vld [vmem:[%s2 + $0x48] sm:$0xff]
      %v227 = vld [vmem:[%s2 + $0x50] sm:$0xff]
      %v228 = vld [vmem:[%s2 + $0x58] sm:$0xff]
      %v229 = vld [vmem:[%s2 + $0x60] sm:$0xff]
      %v230 = vld [vmem:[%s2 + $0x68] sm:$0xff]
      %v231 = vld [vmem:[%s2 + $0x70] sm:$0xff]
      %v232 = vld [vmem:[%s2 + $0x78] sm:$0xff]
      %v233 = vld [vmem:[#allocation2] sm:$0xff]
      %v234 = vld [vmem:[#allocation2 + $0x8] sm:$0xff]
      %v235 = vld [vmem:[#allocation2 + $0x10] sm:$0xff]
      %v236 = vld [vmem:[#allocation2 + $0x18] sm:$0xff]
      %v237 = vld [vmem:[#allocation2 + $0x20] sm:$0xff]
      %v238 = vld [vmem:[#allocation2 + $0x28] sm:$0xff]
      %v239 = vld [vmem:[#allocation2 + $0x30] sm:$0xff]
      %v240 = vld [vmem:[#allocation2 + $0x38] sm:$0xff]
      %v241 = vld [vmem:[#allocation2 + $0x40] sm:$0xff]
      %v242 = vld [vmem:[#allocation2 + $0x48] sm:$0xff]
      %v243 = vld [vmem:[#allocation2 + $0x50] sm:$0xff]
      %v244 = vld [vmem:[#allocation2 + $0x58] sm:$0xff]
      %v245 = vld [vmem:[#allocation2 + $0x60] sm:$0xff]
      %v246 = vld [vmem:[#allocation2 + $0x68] sm:$0xff]
      %v247 = vld [vmem:[#allocation2 + $0x70] sm:$0xff]
      %v248 = vld [vmem:[#allocation2 + $0x78] sm:$0xff]
      %v249 = vadd.f32 %v217, %v233
      %v250 = vadd.f32 %v218, %v234
      %v251 = vadd.f32 %v219, %v235
      %v252 = vadd.f32 %v220, %v236
      %v253 = vadd.f32 %v221, %v237
      %v254 = vadd.f32 %v222, %v238
      %v255 = vadd.f32 %v223, %v239
      %v256 = vadd.f32 %v224, %v240
      %v257 = vadd.f32 %v225, %v241
      %v258 = vadd.f32 %v226, %v242
      %v259 = vadd.f32 %v227, %v243
      %v260 = vadd.f32 %v228, %v244
      %v261 = vadd.f32 %v229, %v245
      %v262 = vadd.f32 %v230, %v246
      %v263 = vadd.f32 %v231, %v247
      %v264 = vadd.f32 %v232, %v248
      %265 = vst [vmem:[%s4] sm:$0xff] %v249
      %266 = vst [vmem:[%s4 + $0x8] sm:$0xff] %v250
      %267 = vst [vmem:[%s4 + $0x10] sm:$0xff] %v251
      %268 = vst [vmem:[%s4 + $0x18] sm:$0xff] %v252
      %269 = vst [vmem:[%s4 + $0x20] sm:$0xff] %v253
      %270 = vst [vmem:[%s4 + $0x28] sm:$0xff] %v254
      %271 = vst [vmem:[%s4 + $0x30] sm:$0xff] %v255
      %272 = vst [vmem:[%s4 + $0x38] sm:$0xff] %v256
      %273 = vst [vmem:[%s4 + $0x40] sm:$0xff] %v257
      %274 = vst [vmem:[%s4 + $0x48] sm:$0xff] %v258
      %275 = vst [vmem:[%s4 + $0x50] sm:$0xff] %v259
      %276 = vst [vmem:[%s4 + $0x58] sm:$0xff] %v260
      %277 = vst [vmem:[%s4 + $0x60] sm:$0xff] %v261
      %278 = vst [vmem:[%s4 + $0x68] sm:$0xff] %v262
      %279 = vst [vmem:[%s4 + $0x70] sm:$0xff] %v263
      %280 = vst [vmem:[%s4 + $0x78] sm:$0xff] %v264
    $region21: #{gnn_encoder_adj_mat.5} parent=1 // pred_fallthru
      _
    // Predicated region
    $region22: #{gnn_encoder_adj_mat.5} parent=1 // pred_check
      _
    $region23: #{gnn_encoder_adj_mat.5} parent=1 // pred_check_branch
      %282 = sbr.rel (0) target = $region25
    $region24: #{gnn_encoder_adj_mat.5} parent=1 // pred_region
      %284 = vsyncadd [#allocation4], 0
      %s285 = sshll.u32 [#allocation3], 4
      %s286 = int_to_ptr.vmem [resolvable:$true] %s285
      %s287 = sshll.u32 %s3, 4
      %s288 = int_to_ptr.hbm [resolvable:$true] %s287
      %293 = dma.vmem_to_hbm [thread:$0]  %s286, 2048, %s288, [#allocation4], 128, 128, 8
    $region25: #{gnn_encoder_adj_mat.5} parent=1 // pred_fallthru
      _
    // Predicated region
    $region26: #{gnn_encoder_adj_mat.5} parent=1 // pred_check
      _
    $region27: #{gnn_encoder_adj_mat.5} parent=1 // pred_check_branch
      %295 = sbr.rel (0) target = $region29
    $region28: #{gnn_encoder_adj_mat.5} parent=1 // pred_region
      _
    $region29: #{gnn_encoder_adj_mat.5} parent=1 // pred_fallthru
      _
    // Predicated region
    $region30: #{gnn_encoder_adj_mat.5} parent=1 // pred_check
      _
    $region31: #{gnn_encoder_adj_mat.5} parent=1 // pred_check_branch
      %297 = sbr.rel (0) target = $region33
    $region32: #{gnn_encoder_adj_mat.5} parent=1 // pred_region
      %299 = dma.done [#allocation4], 2048
    $region33: #{gnn_encoder_adj_mat.5} parent=1 // pred_fallthru
      _
    // Predicated region
    $region34: #{gnn_encoder_adj_mat.5} parent=1 // pred_check
      _
    $region35: #{gnn_encoder_adj_mat.5} parent=1 // pred_check_branch
      %301 = sbr.rel (0) target = $region37
    $region36: #{gnn_encoder_adj_mat.5} parent=1 // pred_region
      _
    $region37: #{gnn_encoder_adj_mat.5} parent=1 // pred_fallthru
      _
    %302 = vsyncpa [#allocation4], 1

</llo_original>
